<compile_context>
chip_gen: v6e
topology: v6e:2x2x1
jax: 0.10.0
libtpu: 0.0.40
codegen_flags: <defaults>
</compile_context>

<pallas_src>
import math

import jax
import jax.numpy as jnp
from jax.experimental import pallas as pl
from jax.experimental.pallas import tpu as pltpu


_LANE = 128
_MAX_BATCH_TILE = 512
# Budget for the double-buffered x tile (dominant VMEM consumer); kept well under the
# 32 MiB scoped limit we request so weight/output buffers + compiler scratch fit too.
_VMEM_TILE_BUDGET_BYTES = 16 * 1024 * 1024


def _round_up(n, m):
    return ((n + m - 1) // m) * m


def _linear_kernel(x_ref, w_ref, b_ref, o_ref):
    """x_ref: (TB, D) VMEM, w_ref: (1, D) VMEM, b_ref: (1,) SMEM, o_ref: (1, TB) VMEM."""
    # A @ B^T contraction; the (1, TB) result keeps the batch on the lane axis, so the
    # output store is lane-dense (unmasked wide stores).
    acc = jnp.einsum(
        "od,td->ot", w_ref[...], x_ref[...], preferred_element_type=jnp.float32
    )
    o_ref[...] = (acc + b_ref[0]).astype(o_ref.dtype)


def linear_regression_forward(x, w, b):
    """Forward pass of LinearRegression.

    x: (B, D) float32
    w: (1, D) float32   (torch nn.Linear weight layout, output_dim == 1)
    b: (1,)   float32
    returns (B, 1) float32 == x @ w.T + b
    """
    B, D = x.shape
    assert w.shape == (1, D), w.shape
    assert b.shape == (1,), b.shape

    itemsize = x.dtype.itemsize

    # Batch tile: multiple of 128 (lane-dense output blocks), as large as the VMEM
    # budget allows, capped at 512 rows (measured mem-bound sweet spot).
    tb = _MAX_BATCH_TILE
    while tb > _LANE and 2 * tb * D * itemsize > _VMEM_TILE_BUDGET_BYTES:
        tb //= 2
    # TODO(synk): tile the reduction dim (D) with a VMEM accumulator for very large
    # input_dim; here a full-width (TB, D) block is loaded per grid step.
    tb = min(tb, _round_up(B, _LANE))

    b_pad = _round_up(B, tb)
    if b_pad != B:
        x = jnp.pad(x, ((0, b_pad - B), (0, 0)))
    num_tiles = b_pad // tb

    out = pl.pallas_call(
        _linear_kernel,
        out_shape=jax.ShapeDtypeStruct((1, b_pad), x.dtype),
        grid_spec=pl.GridSpec(
            grid=(num_tiles,),
            in_specs=[
                pl.BlockSpec((tb, D), lambda i: (i, 0)),            # x tile (pipelined)
                pl.BlockSpec((1, D), lambda i: (0, 0)),             # weight row (stays resident)
                pl.BlockSpec(memory_space=pltpu.MemorySpace.SMEM),  # bias scalar in SMEM
            ],
            out_specs=pl.BlockSpec((1, tb), lambda i: (0, i)),      # lane-dense output
        ),
        compiler_params=pltpu.CompilerParams(
            dimension_semantics=("parallel",),
            vmem_limit_bytes=32 * 1024 * 1024,
        ),
    )(x, w, b)

    return out[0, :B].reshape(B, 1)


def init_params(key, input_dim, output_dim=1, dtype=jnp.float32):
    """Matches the PyTorch module: xavier_uniform_ weight, default nn.Linear bias init."""
    assert output_dim == 1, "LinearRegression uses output_dim=1"
    # torch.nn.init.xavier_uniform_: U(-a, a), a = sqrt(6 / (fan_in + fan_out))
    a = math.sqrt(6.0 / (input_dim + output_dim))
    kw, kb = jax.random.split(key)
    # torch weight layout: (output_dim, input_dim)
    w = jax.random.uniform(kw, (output_dim, input_dim), dtype=dtype, minval=-a, maxval=a)
    # nn.Linear default bias init: U(-1/sqrt(fan_in), 1/sqrt(fan_in))
    bb = 1.0 / math.sqrt(input_dim)
    b = jax.random.uniform(kb, (output_dim,), dtype=dtype, minval=-bb, maxval=bb)
    return w, b


if __name__ == "__main__":
    key = jax.random.PRNGKey(0)
    kx, kp, kx2, kp2 = jax.random.split(key, 4)

    # Small shapes consistent with the module (single-tile path).
    batch, input_dim = 8, 32
    x = jax.random.normal(kx, (batch, input_dim), dtype=jnp.float32)
    w, b = init_params(kp, input_dim)

    y = linear_regression_forward(x, w, b)
    jax.block_until_ready(y)

    y_ref = x @ w.T + b
    assert y.shape == (batch, 1)
    assert jnp.allclose(y, y_ref, atol=1e-5, rtol=1e-5)

    # Larger batch: exercises the multi-tile pipelined path + batch padding.
    B2, D2 = 1000, 256
    x2 = jax.random.normal(kx2, (B2, D2), dtype=jnp.float32)
    w2, b2 = init_params(kp2, D2)

    y2 = linear_regression_forward(x2, w2, b2)
    jax.block_until_ready(y2)

    y2_ref = x2 @ w2.T + b2
    assert y2.shape == (B2, 1)
    assert jnp.allclose(y2, y2_ref, atol=1e-3, rtol=1e-3)

    print("KERNEL_OK")
</pallas_src>

<mosaic_0001>
module attributes {stable_mosaic.version = 11 : i64} {
  func.func @_linear_kernel(%arg0: i32, %arg1: memref<128x32xf32, #tpu.memory_space<vmem>>, %arg2: memref<1x32xf32, #tpu.memory_space<vmem>>, %arg3: memref<1xf32, #tpu.memory_space<smem>>, %arg4: memref<1x128xf32, #tpu.memory_space<vmem>>) attributes {dimension_semantics = [#tpu.dimension_semantics<parallel>], iteration_bounds = array<i64: 1>, scalar_prefetch = 0 : i64, scratch_operands = 0 : i64, tpu.core_type = #tpu.core_type<tc>, window_params = [{transform_indices = @transform_0, window_bounds = array<i64: 128, 32>}, {pipeline_mode = #tpu.pipeline_mode<synchronous>, transform_indices = @transform_1, window_bounds = array<i64: 1, 32>}, {transform_indices = @transform_2, window_bounds = array<i64: 1>}, {transform_indices = @transform_3, window_bounds = array<i64: 1, 128>}]} {
    %c0 = arith.constant 0 : index
    %c0_0 = arith.constant 0 : index
    %0 = vector.load %arg2[%c0, %c0_0] : memref<1x32xf32, #tpu.memory_space<vmem>>, vector<1x32xf32>
    %c0_1 = arith.constant 0 : index
    %c0_2 = arith.constant 0 : index
    %1 = vector.load %arg1[%c0_1, %c0_2] : memref<128x32xf32, #tpu.memory_space<vmem>>, vector<128x32xf32>
    "tpu.trace_start"() <{level = 10 : i32, message = "od,td->ot"}> : () -> ()
    %cst = arith.constant dense<0.000000e+00> : vector<1x128xf32>
    %2 = tpu.matmul %0, %1, %cst {dimension_numbers = #tpu.dot_dimension_numbers<[1], [1], [0], [0], [0, 0, 1, 0], [], []>} : vector<1x32xf32>, vector<128x32xf32>, vector<1x128xf32> -> vector<1x128xf32>
    "tpu.trace_stop"() : () -> ()
    %c0_3 = arith.constant 0 : index
    %3 = memref.load %arg3[%c0_3] : memref<1xf32, #tpu.memory_space<smem>>
    %4 = vector.broadcast %3 : f32 to vector<1x128xf32>
    %5 = arith.addf %2, %4 : vector<1x128xf32>
    %c0_4 = arith.constant 0 : index
    %c0_5 = arith.constant 0 : index
    %6 = vector.load %arg4[%c0_4, %c0_5] : memref<1x128xf32, #tpu.memory_space<vmem>>, vector<1x128xf32>
    tpu.vector_store %arg4[%c0_4, %c0_5], %5 {strides = array<i32>} : memref<1x128xf32, #tpu.memory_space<vmem>>, vector<1x128xf32>,
    return
  }
  func.func @transform_0(%arg0: i32) -> (i32, i32) {
    %c0_i32 = arith.constant 0 : i32
    %c0_i32_0 = arith.constant 0 : i32
    return %arg0, %c0_i32 : i32, i32
  }
  func.func @transform_1(%arg0: i32) -> (i32, i32) {
    %c0_i32 = arith.constant 0 : i32
    %c0_i32_0 = arith.constant 0 : i32
    %c0_i32_1 = arith.constant 0 : i32
    return %c0_i32, %c0_i32_0 : i32, i32
  }
  func.func @transform_2(%arg0: i32) -> i32 {
    %c0_i32 = arith.constant 0 : i32
    %c0_i32_0 = arith.constant 0 : i32
    return %c0_i32 : i32
  }
  func.func @transform_3(%arg0: i32) -> (i32, i32) {
    %c0_i32 = arith.constant 0 : i32
    %c0_i32_0 = arith.constant 0 : i32
    return %c0_i32, %arg0 : i32, i32
  }
}

</mosaic_0001>

<llo_original>
// kernel: tpu_custom_call.1
$region0: #{tpu_custom_call.1}
  #allocation0 [shape = 'u32[]', space=smem, size = 0x4, offset = 0x4, fixed_abs, tag = 'smem constant byte address 0x4 - core index']
  #allocation1 [shape = 'u32[144,128]{1,0:T(1,128)}', space=vmem, size = 0x12000, scoped, tag = 'internal scratch']
  #allocation2 [shape = 'f32[1]{0:T(128)S(6)}', space=smem, size = 0x200, scoped, tag = 'scoped memory for tpu_custom_call.1']
  %s0 = inlined_call_operand.vmem [shape: f32[128,32], index: 0, kind: input, shape index: {}]
  %s1 = inlined_call_operand.vmem [shape: f32[1,32], index: 1, kind: input, shape index: {}]
  %s2 = inlined_call_operand.<no memory space> [shape: f32[1], index: 2, kind: input, shape index: {}]
  %s3 = inlined_call_operand.hbm [shape: f32[1,128], index: 3, kind: output, shape index: {}]
  %s4 = sld [smem:[#allocation0]]
  $region22: #{tpu_custom_call.1} parent=0
    _
  %s6 = ssub.s32 1, %s4
  %s7 = scalar_select 0, %s6, %s4
  %8 = sst [smem:[#allocation2]] %s2
  $region1: #{tpu_custom_call.1} parent=0
    #allocation3 [shape = 'u8[512]{0}', space=vmem, size = 0x400, scoped, tag = 'output window, operand 0, single buffered']
    #allocation4 [shape = 's32[1]{0}', space=sflag, size = 0x4, scoped, tag = 'scoped memory for tpu_custom_call.1']
    %9 = vsyncpa [#allocation4], 0
    // Predicated region
    $region2: #{tpu_custom_call.1} parent=1 // pred_check
      _
    $region3: #{tpu_custom_call.1} parent=1 // pred_check_branch
      %11 = sbr.rel (0) target = $region5
    $region4: #{tpu_custom_call.1} parent=1 // pred_region
      _
    $region5: #{tpu_custom_call.1} parent=1 // pred_fallthru
      _
    // Predicated region
    $region6: #{tpu_custom_call.1} parent=1 // pred_check
      _
    $region7: #{tpu_custom_call.1} parent=1 // pred_check_branch
      %13 = sbr.rel (0) target = $region9
    $region8: #{tpu_custom_call.1} parent=1 // pred_region
      _
    $region9: #{tpu_custom_call.1} parent=1 // pred_fallthru
      _
    // Predicated region
    $region10: #{tpu_custom_call.1} parent=1 // pred_check
      _
    $region11: #{tpu_custom_call.1} parent=1 // pred_check_branch
      %15 = sbr.rel (0) target = $region13
    $region12: #{tpu_custom_call.1} parent=1 // pred_region
      _
    $region13: #{tpu_custom_call.1} parent=1 // pred_fallthru
      _
    %v16 = vld [vmem:[%s1] sm:$0x1]
    %v17 = vld [vmem:[%s0] sm:$0xff]
    %v18 = vld [vmem:[%s0 + $0x8] sm:$0xff]
    %v19 = vld [vmem:[%s0 + $0x10] sm:$0xff]
    %v20 = vld [vmem:[%s0 + $0x18] sm:$0xff]
    %v21 = vld [vmem:[%s0 + $0x20] sm:$0xff]
    %v22 = vld [vmem:[%s0 + $0x28] sm:$0xff]
    %v23 = vld [vmem:[%s0 + $0x30] sm:$0xff]
    %v24 = vld [vmem:[%s0 + $0x38] sm:$0xff]
    %v25 = vld [vmem:[%s0 + $0x40] sm:$0xff]
    %v26 = vld [vmem:[%s0 + $0x48] sm:$0xff]
    %v27 = vld [vmem:[%s0 + $0x50] sm:$0xff]
    %v28 = vld [vmem:[%s0 + $0x58] sm:$0xff]
    %v29 = vld [vmem:[%s0 + $0x60] sm:$0xff]
    %v30 = vld [vmem:[%s0 + $0x68] sm:$0xff]
    %v31 = vld [vmem:[%s0 + $0x70] sm:$0xff]
    %v32 = vld [vmem:[%s0 + $0x78] sm:$0xff]
    %s33 = sld [smem:[#allocation2]]
    %v34 = vstv %s33
    %vm35 = vcmask 261120
    %v37 = vsel %vm35, %v16, 0
    %v40 = vsel %vm35, %v17, 0
    %v43 = vsel %vm35, %v18, 0
    %v46 = vsel %vm35, %v19, 0
    %v49 = vsel %vm35, %v20, 0
    %v52 = vsel %vm35, %v21, 0
    %v55 = vsel %vm35, %v22, 0
    %v58 = vsel %vm35, %v23, 0
    %v61 = vsel %vm35, %v24, 0
    %v64 = vsel %vm35, %v25, 0
    %v67 = vsel %vm35, %v26, 0
    %v70 = vsel %vm35, %v27, 0
    %v73 = vsel %vm35, %v28, 0
    %v76 = vsel %vm35, %v29, 0
    %v79 = vsel %vm35, %v30, 0
    %v82 = vsel %vm35, %v31, 0
    %v85 = vsel %vm35, %v32, 0
    %87 = vmatprep.subr.mxu0 0.0
    %88 = vmatpush1.xpose.msra.mxu0 %v85
    %89 = vmatprep.subr.mxu0 0.0
    %90 = vmatpush1.xpose.msra.mxu0 %v82
    %91 = vmatprep.subr.mxu0 0.0
    %92 = vmatpush1.xpose.msra.mxu0 %v79
    %93 = vmatprep.subr.mxu0 0.0
    %94 = vmatpush1.xpose.msra.mxu0 %v76
    %95 = vmatprep.subr.mxu0 0.0
    %96 = vmatpush1.xpose.msra.mxu0 %v73
    %97 = vmatprep.subr.mxu0 0.0
    %98 = vmatpush1.xpose.msra.mxu0 %v70
    %99 = vmatprep.subr.mxu0 0.0
    %100 = vmatpush1.xpose.msra.mxu0 %v67
    %101 = vmatprep.subr.mxu0 0.0
    %102 = vmatpush1.xpose.msra.mxu0 %v64
    %103 = vmatprep.subr.mxu0 0.0
    %104 = vmatpush1.xpose.msra.mxu0 %v61
    %105 = vmatprep.subr.mxu0 0.0
    %106 = vmatpush1.xpose.msra.mxu0 %v58
    %107 = vmatprep.subr.mxu0 0.0
    %108 = vmatpush1.xpose.msra.mxu0 %v55
    %109 = vmatprep.subr.mxu0 0.0
    %110 = vmatpush1.xpose.msra.mxu0 %v52
    %111 = vmatprep.subr.mxu0 0.0
    %112 = vmatpush1.xpose.msra.mxu0 %v49
    %113 = vmatprep.subr.mxu0 0.0
    %114 = vmatpush1.xpose.msra.mxu0 %v46
    %115 = vmatprep.subr.mxu0 0.0
    %116 = vmatpush1.xpose.msra.mxu0 %v43
    %117 = vmatprep.subr.mxu0 0.0
    %118 = vmatpush1.xpose.msra.mxu0 %v40
    %119 = vmatprep.subr.mxu0 0.0
    %120 = vmatpush2.xpose.msra.mxu0 0.0
    %121 = vmatprep.subr.mxu0 0.0
    %122 = vmatpush2.xpose.msra.mxu0 0.0
    %123 = vmatprep.subr.mxu0 0.0
    %124 = vmatpush2.xpose.msra.mxu0 0.0
    %125 = vmatprep.subr.mxu0 0.0
    %126 = vmatpush2.xpose.msra.mxu0 0.0
    %127 = vmatprep.subr.mxu0 0.0
    %128 = vmatpush2.xpose.msra.mxu0 0.0
    %129 = vmatprep.subr.mxu0 0.0
    %130 = vmatpush2.xpose.msra.mxu0 0.0
    %131 = vmatprep.subr.mxu0 0.0
    %132 = vmatpush2.xpose.msra.mxu0 0.0
    %133 = vmatprep.subr.mxu0 0.0
    %134 = vmatpush2.xpose.msra.mxu0 0.0
    %135 = vmatprep.subr.mxu0 0.0
    %136 = vmatpush2.xpose.msra.mxu0 0.0
    %137 = vmatprep.subr.mxu0 0.0
    %138 = vmatpush2.xpose.msra.mxu0 0.0
    %139 = vmatprep.subr.mxu0 0.0
    %140 = vmatpush2.xpose.msra.mxu0 0.0
    %141 = vmatprep.subr.mxu0 0.0
    %142 = vmatpush2.xpose.msra.mxu0 0.0
    %143 = vmatprep.subr.mxu0 0.0
    %144 = vmatpush2.xpose.msra.mxu0 0.0
    %145 = vmatprep.subr.mxu0 0.0
    %146 = vmatpush2.xpose.msra.mxu0 0.0
    %147 = vmatprep.subr.mxu0 0.0
    %148 = vmatpush2.xpose.msra.mxu0 0.0
    %149 = vmatprep.subr.mxu0 0.0
    %150 = vmatpush2.xpose.msra.mxu0 0.0
    %151 = vmatprep.mubr.f32.mxu0 0.0
    %152 = vmatmul.mubr.f32.gmra.mxu0 %v37
    %v153 = vpop.f32.mrf.mxu0
    %v154 = vadd.f32 %v34, %v153
    %v155 = vpop.f32.mrf.mxu0
    %156 = vdwg.mxu0
    %157 = vst [vmem:[#allocation3] sm:$0x1] %v154
    // Predicated region
    $region14: #{tpu_custom_call.1} parent=1 // pred_check
      _
    $region15: #{tpu_custom_call.1} parent=1 // pred_check_branch
      %159 = sbr.rel (0) target = $region17
    $region16: #{tpu_custom_call.1} parent=1 // pred_region
      %s161 = ssub.s32 16, 16
      %162 = vsyncadd [#allocation4], %s161
      %s164 = sshll.u32 [#allocation3], 4
      %s165 = int_to_ptr.vmem [resolvable:$true] %s164
      %167 = dma.vmem_to_hbm [thread:$0]  %s165, 16, %s3, [#allocation4]
    $region17: #{tpu_custom_call.1} parent=1 // pred_fallthru
      _
    // Predicated region
    $region18: #{tpu_custom_call.1} parent=1 // pred_check
      _
    $region19: #{tpu_custom_call.1} parent=1 // pred_check_branch
      %169 = sbr.rel (0) target = $region21
    $region20: #{tpu_custom_call.1} parent=1 // pred_region
      %170 = dma.done [#allocation4], 16
    $region21: #{tpu_custom_call.1} parent=1 // pred_fallthru
      _
    %171 = vsyncpa [#allocation4], 1

</llo_original>
